<compile_context>
chip_gen: v6e
topology: v6e:2x2x1
jax: 0.10.0
libtpu: 0.0.40
codegen_flags: <defaults>
</compile_context>

<pallas_src>
import math

import jax
import jax.numpy as jnp
from jax import lax
from jax.experimental import pallas as pl
from jax.experimental.pallas import tpu as pltpu


def _round_up(n, m):
    return ((n + m - 1) // m) * m


def _choose_tile(batch, tile_b):
    """Pick a lane-axis batch tile: multiple of 256, VMEM-safe, >=4 grid steps."""
    tile = max(256, _round_up(min(int(tile_b), 32768), 256))
    padded = _round_up(batch, 256)
    tile = min(tile, padded)
    # Keep at least 4 grid steps when the batch allows it so both v7x
    # TensorCores get work (no-op on single-TC v5e/v6e).
    if padded >= 4 * 256:
        tile = min(tile, _round_up((padded + 3) // 4, 256))
    padded = _round_up(batch, tile)
    return tile, padded


def _make_mlp_kernel(num_layers, compute_dtype):
    """Kernel for one batch tile.  Activations live as (features, TILE_B)."""

    def kernel(*refs):
        x_ref = refs[0]            # (TILE_B, state) -- caller's natural layout
        o_ref = refs[-1]           # (action, TILE_B) -- lane-dense output
        wb = refs[1:-1]            # w1, b1, w2, b2, ...

        xc = x_ref[...].astype(compute_dtype)
        w, b = wb[0], wb[1]
        # First layer: transpose absorbed into the contraction: W1 @ x.T
        h = lax.dot_general(w[...], xc, (((1,), (1,)), ((), ())),
                            preferred_element_type=jnp.float32) + b[...]
        if num_layers > 1:
            h = jnp.maximum(h, 0.0)

        for li in range(1, num_layers):
            w, b = wb[2 * li], wb[2 * li + 1]
            h = jnp.dot(w[...], h.astype(compute_dtype),
                        preferred_element_type=jnp.float32) + b[...]
            if li < num_layers - 1:
                h = jnp.maximum(h, 0.0)

        o_ref[...] = h.astype(o_ref.dtype)

    return kernel


def fully_connected_brain(x, params, *, tile_b=8192,
                          compute_dtype=jnp.bfloat16,
                          small_batch_threshold=512,
                          force_kernel=False):
    """x: (batch, state_size).  params: list of (W, b), W: (out, in), b: (out, 1).

    compute_dtype controls the MXU operand dtype (bf16 default, f32 exact);
    accumulation, bias add and ReLU are always f32.
    """
    batch, state_size = x.shape
    action_size = params[-1][0].shape[0]

    # Tiny batches (typical RL inference) are dominated by pad/launch overhead.
    if batch < small_batch_threshold and not force_kernel:
        return reference_forward(x, params)

    tile, padded_batch = _choose_tile(batch, tile_b)

    x_p = x.astype(jnp.float32)
    if padded_batch != batch:
        x_p = jnp.pad(x_p, ((0, padded_batch - batch), (0, 0)))

    flat_args = [x_p]
    in_specs = [pl.BlockSpec((tile, state_size), lambda i: (i, 0))]
    for w, b in params:
        flat_args += [w.astype(compute_dtype), b.astype(jnp.float32)]
        in_specs += [
            pl.BlockSpec(w.shape, lambda i: (0, 0)),   # VMEM-resident
            pl.BlockSpec(b.shape, lambda i: (0, 0)),
        ]

    # Advisory cost estimate so XLA schedules surrounding ops around this call.
    sizes = [state_size] + [w.shape[0] for w, _ in params]
    flops = 2 * padded_batch * sum(a * b for a, b in zip(sizes[:-1], sizes[1:]))
    param_bytes = sum(w.size * jnp.dtype(compute_dtype).itemsize + b.size * 4
                      for w, b in params)
    bytes_accessed = x_p.size * 4 + padded_batch * action_size * 4 + param_bytes

    out_t = pl.pallas_call(
        _make_mlp_kernel(len(params), compute_dtype),
        out_shape=jax.ShapeDtypeStruct((action_size, padded_batch), jnp.float32),
        grid=(padded_batch // tile,),
        in_specs=in_specs,
        out_specs=pl.BlockSpec((action_size, tile), lambda i: (0, i)),
        compiler_params=pltpu.CompilerParams(
            dimension_semantics=("parallel",),       # 2-TC sharding on v7x
            vmem_limit_bytes=48 * 1024 * 1024),
        cost_estimate=pl.CostEstimate(
            flops=int(flops), transcendentals=0,
            bytes_accessed=int(bytes_accessed)),
    )(*flat_args)

    # (action, padded_batch) -> (batch, action): one small slice+transpose.
    return out_t[:, :batch].T


def init_params(key, state_size, action_size, hidden_sizes=(32, 32, 16)):
    """Deterministic init mimicking nn.Linear's U(-1/sqrt(fan_in), +1/sqrt(fan_in)).

    Weights are PyTorch-style (out_features, in_features); biases are
    (out_features, 1) so they broadcast over the lane (batch) axis in-kernel.
    """
    sizes = [state_size] + list(hidden_sizes) + [action_size]
    params = []
    for fan_in, fan_out in zip(sizes[:-1], sizes[1:]):
        k_w, k_b, key = jax.random.split(key, 3)
        bound = 1.0 / math.sqrt(fan_in)
        w = jax.random.uniform(k_w, (fan_out, fan_in), jnp.float32, -bound, bound)
        b = jax.random.uniform(k_b, (fan_out, 1), jnp.float32, -bound, bound)
        params.append((w, b))
    return params


def reference_forward(x, params):
    """Pure-JAX reference mirroring the PyTorch module's forward (f32)."""
    h = x
    for w, b in params[:-1]:
        h = jnp.maximum(h @ w.T + b[:, 0], 0.0)
    w, b = params[-1]
    return h @ w.T + b[:, 0]


if __name__ == "__main__":
    state_size = 8
    action_size = 4

    key = jax.random.PRNGKey(0)
    k_p, k1, k2 = jax.random.split(key, 3)
    params = init_params(k_p, state_size, action_size)

    # 1) Tiny-batch path (RL-style usage): small-batch fallback, exact.
    x_small = jax.random.normal(k1, (2, state_size), jnp.float32)
    out_small = jax.block_until_ready(fully_connected_brain(x_small, params))
    ref_small = reference_forward(x_small, params)
    assert out_small.shape == (2, action_size), out_small.shape
    assert jnp.allclose(out_small, ref_small, atol=1e-5, rtol=1e-5)

    # 2) Kernel path, f32 MXU operands: exact check, ragged (padded) batch,
    #    multi-step grid.
    batch = 1500
    x = jax.random.normal(k2, (batch, state_size), jnp.float32)
    ref = reference_forward(x, params)
    out_f32 = jax.block_until_ready(
        fully_connected_brain(x, params, compute_dtype=jnp.float32,
                              force_kernel=True))
    assert out_f32.shape == (batch, action_size), out_f32.shape
    assert jnp.allclose(out_f32, ref, atol=1e-4, rtol=1e-4), \
        float(jnp.max(jnp.abs(out_f32 - ref)))

    # 3) Kernel path, default bf16 MXU operands with f32 accumulation.
    out_bf16 = jax.block_until_ready(
        fully_connected_brain(x, params, force_kernel=True))
    assert out_bf16.shape == (batch, action_size), out_bf16.shape
    assert jnp.allclose(out_bf16, ref, atol=3e-2, rtol=3e-2), \
        float(jnp.max(jnp.abs(out_bf16 - ref)))

    print("KERNEL_OK")
</pallas_src>

<mosaic_0001>
module attributes {stable_mosaic.version = 11 : i64} {
  func.func @kernel(%arg0: i32, %arg1: memref<512x8xf32, #tpu.memory_space<vmem>>, %arg2: memref<32x8xf32, #tpu.memory_space<vmem>>, %arg3: memref<32x1xf32, #tpu.memory_space<vmem>>, %arg4: memref<32x32xf32, #tpu.memory_space<vmem>>, %arg5: memref<32x1xf32, #tpu.memory_space<vmem>>, %arg6: memref<16x32xf32, #tpu.memory_space<vmem>>, %arg7: memref<16x1xf32, #tpu.memory_space<vmem>>, %arg8: memref<4x16xf32, #tpu.memory_space<vmem>>, %arg9: memref<4x1xf32, #tpu.memory_space<vmem>>, %arg10: memref<4x512xf32, #tpu.memory_space<vmem>>) attributes {dimension_semantics = [#tpu.dimension_semantics<parallel>], iteration_bounds = array<i64: 3>, scalar_prefetch = 0 : i64, scratch_operands = 0 : i64, tpu.core_type = #tpu.core_type<tc>, window_params = [{transform_indices = @transform_0, window_bounds = array<i64: 512, 8>}, {pipeline_mode = #tpu.pipeline_mode<synchronous>, transform_indices = @transform_1, window_bounds = array<i64: 32, 8>}, {pipeline_mode = #tpu.pipeline_mode<synchronous>, transform_indices = @transform_2, window_bounds = array<i64: 32, 1>}, {pipeline_mode = #tpu.pipeline_mode<synchronous>, transform_indices = @transform_3, window_bounds = array<i64: 32, 32>}, {pipeline_mode = #tpu.pipeline_mode<synchronous>, transform_indices = @transform_4, window_bounds = array<i64: 32, 1>}, {pipeline_mode = #tpu.pipeline_mode<synchronous>, transform_indices = @transform_5, window_bounds = array<i64: 16, 32>}, {pipeline_mode = #tpu.pipeline_mode<synchronous>, transform_indices = @transform_6, window_bounds = array<i64: 16, 1>}, {pipeline_mode = #tpu.pipeline_mode<synchronous>, transform_indices = @transform_7, window_bounds = array<i64: 4, 16>}, {pipeline_mode = #tpu.pipeline_mode<synchronous>, transform_indices = @transform_8, window_bounds = array<i64: 4, 1>}, {transform_indices = @transform_9, window_bounds = array<i64: 4, 512>}]} {
    %c0 = arith.constant 0 : index
    %c0_0 = arith.constant 0 : index
    %0 = vector.load %arg1[%c0, %c0_0] : memref<512x8xf32, #tpu.memory_space<vmem>>, vector<512x8xf32>
    %c0_1 = arith.constant 0 : index
    %c0_2 = arith.constant 0 : index
    %1 = vector.load %arg2[%c0_1, %c0_2] : memref<32x8xf32, #tpu.memory_space<vmem>>, vector<32x8xf32>
    %cst = arith.constant dense<0.000000e+00> : vector<32x512xf32>
    %2 = tpu.matmul %1, %0, %cst {dimension_numbers = #tpu.dot_dimension_numbers<[1], [1], [0], [0], [0, 0, 1, 0], [], []>} : vector<32x8xf32>, vector<512x8xf32>, vector<32x512xf32> -> vector<32x512xf32>
    %c0_3 = arith.constant 0 : index
    %c0_4 = arith.constant 0 : index
    %3 = vector.load %arg3[%c0_3, %c0_4] : memref<32x1xf32, #tpu.memory_space<vmem>>, vector<32x1xf32>
    %4 = vector.broadcast %3 : vector<32x1xf32> to vector<32x512xf32>
    %5 = arith.addf %2, %4 : vector<32x512xf32>
    %cst_5 = arith.constant 0.000000e+00 : f32
    %6 = vector.broadcast %cst_5 : f32 to vector<32x512xf32>
    %7 = arith.maximumf %5, %6 : vector<32x512xf32>
    %c0_6 = arith.constant 0 : index
    %c0_7 = arith.constant 0 : index
    %8 = vector.load %arg4[%c0_6, %c0_7] : memref<32x32xf32, #tpu.memory_space<vmem>>, vector<32x32xf32>
    %cst_8 = arith.constant dense<0.000000e+00> : vector<32x512xf32>
    %9 = tpu.matmul %8, %7, %cst_8 {dimension_numbers = #tpu.dot_dimension_numbers<[1], [0], [0], [1], [0, 0, 1, 1], [], []>} : vector<32x32xf32>, vector<32x512xf32>, vector<32x512xf32> -> vector<32x512xf32>
    %c0_9 = arith.constant 0 : index
    %c0_10 = arith.constant 0 : index
    %10 = vector.load %arg5[%c0_9, %c0_10] : memref<32x1xf32, #tpu.memory_space<vmem>>, vector<32x1xf32>
    %11 = vector.broadcast %10 : vector<32x1xf32> to vector<32x512xf32>
    %12 = arith.addf %9, %11 : vector<32x512xf32>
    %cst_11 = arith.constant 0.000000e+00 : f32
    %13 = vector.broadcast %cst_11 : f32 to vector<32x512xf32>
    %14 = arith.maximumf %12, %13 : vector<32x512xf32>
    %c0_12 = arith.constant 0 : index
    %c0_13 = arith.constant 0 : index
    %15 = vector.load %arg6[%c0_12, %c0_13] : memref<16x32xf32, #tpu.memory_space<vmem>>, vector<16x32xf32>
    %cst_14 = arith.constant dense<0.000000e+00> : vector<16x512xf32>
    %16 = tpu.matmul %15, %14, %cst_14 {dimension_numbers = #tpu.dot_dimension_numbers<[1], [0], [0], [1], [0, 0, 1, 1], [], []>} : vector<16x32xf32>, vector<32x512xf32>, vector<16x512xf32> -> vector<16x512xf32>
    %c0_15 = arith.constant 0 : index
    %c0_16 = arith.constant 0 : index
    %17 = vector.load %arg7[%c0_15, %c0_16] : memref<16x1xf32, #tpu.memory_space<vmem>>, vector<16x1xf32>
    %18 = vector.broadcast %17 : vector<16x1xf32> to vector<16x512xf32>
    %19 = arith.addf %16, %18 : vector<16x512xf32>
    %cst_17 = arith.constant 0.000000e+00 : f32
    %20 = vector.broadcast %cst_17 : f32 to vector<16x512xf32>
    %21 = arith.maximumf %19, %20 : vector<16x512xf32>
    %c0_18 = arith.constant 0 : index
    %c0_19 = arith.constant 0 : index
    %22 = vector.load %arg8[%c0_18, %c0_19] : memref<4x16xf32, #tpu.memory_space<vmem>>, vector<4x16xf32>
    %cst_20 = arith.constant dense<0.000000e+00> : vector<4x512xf32>
    %23 = tpu.matmul %22, %21, %cst_20 {dimension_numbers = #tpu.dot_dimension_numbers<[1], [0], [0], [1], [0, 0, 1, 1], [], []>} : vector<4x16xf32>, vector<16x512xf32>, vector<4x512xf32> -> vector<4x512xf32>
    %c0_21 = arith.constant 0 : index
    %c0_22 = arith.constant 0 : index
    %24 = vector.load %arg9[%c0_21, %c0_22] : memref<4x1xf32, #tpu.memory_space<vmem>>, vector<4x1xf32>
    %25 = vector.broadcast %24 : vector<4x1xf32> to vector<4x512xf32>
    %26 = arith.addf %23, %25 : vector<4x512xf32>
    %c0_23 = arith.constant 0 : index
    %c0_24 = arith.constant 0 : index
    %27 = vector.load %arg10[%c0_23, %c0_24] : memref<4x512xf32, #tpu.memory_space<vmem>>, vector<4x512xf32>
    tpu.vector_store %arg10[%c0_23, %c0_24], %26 {strides = array<i32>} : memref<4x512xf32, #tpu.memory_space<vmem>>, vector<4x512xf32>,
    return
  }
  func.func @transform_0(%arg0: i32) -> (i32, i32) {
    %c0_i32 = arith.constant 0 : i32
    %c0_i32_0 = arith.constant 0 : i32
    return %arg0, %c0_i32 : i32, i32
  }
  func.func @transform_1(%arg0: i32) -> (i32, i32) {
    %c0_i32 = arith.constant 0 : i32
    %c0_i32_0 = arith.constant 0 : i32
    %c0_i32_1 = arith.constant 0 : i32
    return %c0_i32, %c0_i32_0 : i32, i32
  }
  func.func @transform_2(%arg0: i32) -> (i32, i32) {
    %c0_i32 = arith.constant 0 : i32
    %c0_i32_0 = arith.constant 0 : i32
    %c0_i32_1 = arith.constant 0 : i32
    return %c0_i32, %c0_i32_0 : i32, i32
  }
  func.func @transform_3(%arg0: i32) -> (i32, i32) {
    %c0_i32 = arith.constant 0 : i32
    %c0_i32_0 = arith.constant 0 : i32
    %c0_i32_1 = arith.constant 0 : i32
    return %c0_i32, %c0_i32_0 : i32, i32
  }
  func.func @transform_4(%arg0: i32) -> (i32, i32) {
    %c0_i32 = arith.constant 0 : i32
    %c0_i32_0 = arith.constant 0 : i32
    %c0_i32_1 = arith.constant 0 : i32
    return %c0_i32, %c0_i32_0 : i32, i32
  }
  func.func @transform_5(%arg0: i32) -> (i32, i32) {
    %c0_i32 = arith.constant 0 : i32
    %c0_i32_0 = arith.constant 0 : i32
    %c0_i32_1 = arith.constant 0 : i32
    return %c0_i32, %c0_i32_0 : i32, i32
  }
  func.func @transform_6(%arg0: i32) -> (i32, i32) {
    %c0_i32 = arith.constant 0 : i32
    %c0_i32_0 = arith.constant 0 : i32
    %c0_i32_1 = arith.constant 0 : i32
    return %c0_i32, %c0_i32_0 : i32, i32
  }
  func.func @transform_7(%arg0: i32) -> (i32, i32) {
    %c0_i32 = arith.constant 0 : i32
    %c0_i32_0 = arith.constant 0 : i32
    %c0_i32_1 = arith.constant 0 : i32
    return %c0_i32, %c0_i32_0 : i32, i32
  }
  func.func @transform_8(%arg0: i32) -> (i32, i32) {
    %c0_i32 = arith.constant 0 : i32
    %c0_i32_0 = arith.constant 0 : i32
    %c0_i32_1 = arith.constant 0 : i32
    return %c0_i32, %c0_i32_0 : i32, i32
  }
  func.func @transform_9(%arg0: i32) -> (i32, i32) {
    %c0_i32 = arith.constant 0 : i32
    %c0_i32_0 = arith.constant 0 : i32
    return %c0_i32, %arg0 : i32, i32
  }
}

</mosaic_0001>

<llo_original>
// kernel: tpu_custom_call.1
$region0: #{tpu_custom_call.1}
  #allocation0 [shape = 'u32[]', space=smem, size = 0x4, offset = 0x4, fixed_abs, tag = 'smem constant byte address 0x4 - core index']
  #allocation1 [shape = 'u32[144,128]{1,0:T(1,128)}', space=vmem, size = 0x12000, scoped, tag = 'internal scratch']
  %s0 = inlined_call_operand.vmem [shape: f32[1536,8], index: 0, kind: input, shape index: {}]
  %s1 = inlined_call_operand.vmem [shape: f32[32,8], index: 1, kind: input, shape index: {}]
  %s2 = inlined_call_operand.vmem [shape: f32[32,1], index: 2, kind: input, shape index: {}]
  %s3 = inlined_call_operand.vmem [shape: f32[32,32], index: 3, kind: input, shape index: {}]
  %s4 = inlined_call_operand.vmem [shape: f32[32,1], index: 4, kind: input, shape index: {}]
  %s5 = inlined_call_operand.vmem [shape: f32[16,32], index: 5, kind: input, shape index: {}]
  %s6 = inlined_call_operand.vmem [shape: f32[16,1], index: 6, kind: input, shape index: {}]
  %s7 = inlined_call_operand.vmem [shape: f32[4,16], index: 7, kind: input, shape index: {}]
  %s8 = inlined_call_operand.vmem [shape: f32[4,1], index: 8, kind: input, shape index: {}]
  %s9 = inlined_call_operand.hbm [shape: f32[4,1536], index: 9, kind: output, shape index: {}]
  %s10 = sld [smem:[#allocation0]]
  $region69: #{tpu_custom_call.1} parent=0
    _
  %s12 = ssub.s32 1, %s10
  %s13 = scalar_select 0, %s12, %s10
  $region1: #{tpu_custom_call.1} parent=0
    #allocation2 [shape = 'u8[16384]{0}', space=vmem, size = 0x4000, scoped, tag = 'output window, operand 0']
    #allocation3 [shape = 's32[2]{0}', space=sflag, size = 0x8, scoped, tag = 'scoped memory for tpu_custom_call.1']
    %14 = vsyncpa [#allocation3], 0
    %s15 = scalar_lea.sflag [#allocation3], 1
    %16 = vsyncpa %s15, 0
    loop: start=0, step=1, limit=5
    $region2: #{tpu_custom_call.1} parent=1 // loop_pre_header
      _
    $region3: #{tpu_custom_call.1} parent=1 // loop_header
      %s18 = sphi 0, %s22
      %p19 = scmp.ge.s32.totalorder %s18, 5
      %s28 = sphi 0, %s30
      %s31 = sphi 0, %s28
      %s32 = sphi 0, %s31
      %s48 = sphi 0, %s32
      %s52 = sphi 0, %s52
      %s54 = sphi 0, %s52
      %s55 = sphi 0, %s54
      %s69 = sphi 0, %s55
      %s73 = sphi 0, %s73
      %s75 = sphi 0, %s73
      %s76 = sphi 0, %s75
      %s90 = sphi 0, %s76
      %s94 = sphi 0, %s94
      %s96 = sphi 0, %s94
      %s97 = sphi 0, %s96
      %s111 = sphi 0, %s97
      %s115 = sphi 0, %s115
      %s117 = sphi 0, %s115
      %s118 = sphi 0, %s117
      %s132 = sphi 0, %s118
      %s136 = sphi 0, %s136
      %s138 = sphi 0, %s136
      %s139 = sphi 0, %s138
      %s153 = sphi 0, %s139
      %s157 = sphi 0, %s157
      %s159 = sphi 0, %s157
      %s160 = sphi 0, %s159
      %s174 = sphi 0, %s160
      %s178 = sphi 0, %s178
      %s180 = sphi 0, %s178
      %s181 = sphi 0, %s180
      %s195 = sphi 0, %s181
      %s199 = sphi 0, %s199
      %s201 = sphi 0, %s199
      %s202 = sphi 0, %s201
      %s216 = sphi 0, %s202
      %s222 = sphi 0, %s224
      %s225 = sphi 0, %s222
      %s226 = sphi 0, %s225
      %s242 = sphi 0, %s226
    $region4: #{tpu_custom_call.1} parent=1 // loop_header_branch
      %21 = sbr.rel (%p19) target = $region8
    $region5: #{tpu_custom_call.1} parent=1 // loop_body
      %s23 = ssub.s32 %s18, 1
      %s24 = ssub.s32 %s18, 2
      %s25 = sadd.s32 %s18, 1
      %s26 = ssub.s32 %s18, %s25
      %p27 = scmp.eq.s32.totalorder %s26, 0
      %s29 = sadd.s32 %s28, 1
      %s30 = scalar_select %p27, %s28, %s29
      %p33 = pneg %p27
      %p34 = scmp.eq.s32.totalorder %s18, 2
      %p35 = por %p33, %p34
      %p36 = scmp.ne.s32.totalorder %s28, %s31
      %p37 = scmp.eq.s32.totalorder %s18, 0
      %p38 = por %p36, %p37
      %p39 = scmp.ne.s32.totalorder %s28, %s31
      %p40 = scmp.eq.s32.totalorder %s23, 2
      %p41 = por %p39, %p40
      %p42 = scmp.ne.s32.totalorder %s31, %s32
      %p43 = scmp.eq.s32.totalorder %s23, 0
      %p44 = por %p42, %p43
      %p45 = scmp.ne.s32.totalorder %s31, %s32
      %p46 = scmp.eq.s32.totalorder %s24, 2
      %p47 = por %p45, %p46
      %p49 = scmp.ne.s32.totalorder %s32, %s48
      %p50 = scmp.eq.s32.totalorder %s24, 0
      %p51 = por %p49, %p50
      %s53 = sadd.s32 %s52, 1
      %p56 = scmp.eq.s32.totalorder %s18, 2
      %p57 = scmp.ne.s32.totalorder %s52, %s54
      %p58 = scmp.eq.s32.totalorder %s18, 0
      %p59 = por %p57, %p58
      %p60 = scmp.ne.s32.totalorder %s52, %s54
      %p61 = scmp.eq.s32.totalorder %s23, 2
      %p62 = por %p60, %p61
      %p63 = scmp.ne.s32.totalorder %s54, %s55
      %p64 = scmp.eq.s32.totalorder %s23, 0
      %p65 = por %p63, %p64
      %p66 = scmp.ne.s32.totalorder %s54, %s55
      %p67 = scmp.eq.s32.totalorder %s24, 2
      %p68 = por %p66, %p67
      %p70 = scmp.ne.s32.totalorder %s55, %s69
      %p71 = scmp.eq.s32.totalorder %s24, 0
      %p72 = por %p70, %p71
      %s74 = sadd.s32 %s73, 1
      %p77 = scmp.eq.s32.totalorder %s18, 2
      %p78 = scmp.ne.s32.totalorder %s73, %s75
      %p79 = scmp.eq.s32.totalorder %s18, 0
      %p80 = por %p78, %p79
      %p81 = scmp.ne.s32.totalorder %s73, %s75
      %p82 = scmp.eq.s32.totalorder %s23, 2
      %p83 = por %p81, %p82
      %p84 = scmp.ne.s32.totalorder %s75, %s76
      %p85 = scmp.eq.s32.totalorder %s23, 0
      %p86 = por %p84, %p85
      %p87 = scmp.ne.s32.totalorder %s75, %s76
      %p88 = scmp.eq.s32.totalorder %s24, 2
      %p89 = por %p87, %p88
      %p91 = scmp.ne.s32.totalorder %s76, %s90
      %p92 = scmp.eq.s32.totalorder %s24, 0
      %p93 = por %p91, %p92
      %s95 = sadd.s32 %s94, 1
      %p98 = scmp.eq.s32.totalorder %s18, 2
      %p99 = scmp.ne.s32.totalorder %s94, %s96
      %p100 = scmp.eq.s32.totalorder %s18, 0
      %p101 = por %p99, %p100
      %p102 = scmp.ne.s32.totalorder %s94, %s96
      %p103 = scmp.eq.s32.totalorder %s23, 2
      %p104 = por %p102, %p103
      %p105 = scmp.ne.s32.totalorder %s96, %s97
      %p106 = scmp.eq.s32.totalorder %s23, 0
      %p107 = por %p105, %p106
      %p108 = scmp.ne.s32.totalorder %s96, %s97
      %p109 = scmp.eq.s32.totalorder %s24, 2
      %p110 = por %p108, %p109
      %p112 = scmp.ne.s32.totalorder %s97, %s111
      %p113 = scmp.eq.s32.totalorder %s24, 0
      %p114 = por %p112, %p113
      %s116 = sadd.s32 %s115, 1
      %p119 = scmp.eq.s32.totalorder %s18, 2
      %p120 = scmp.ne.s32.totalorder %s115, %s117
      %p121 = scmp.eq.s32.totalorder %s18, 0
      %p122 = por %p120, %p121
      %p123 = scmp.ne.s32.totalorder %s115, %s117
      %p124 = scmp.eq.s32.totalorder %s23, 2
      %p125 = por %p123, %p124
      %p126 = scmp.ne.s32.totalorder %s117, %s118
      %p127 = scmp.eq.s32.totalorder %s23, 0
      %p128 = por %p126, %p127
      %p129 = scmp.ne.s32.totalorder %s117, %s118
      %p130 = scmp.eq.s32.totalorder %s24, 2
      %p131 = por %p129, %p130
      %p133 = scmp.ne.s32.totalorder %s118, %s132
      %p134 = scmp.eq.s32.totalorder %s24, 0
      %p135 = por %p133, %p134
      %s137 = sadd.s32 %s136, 1
      %p140 = scmp.eq.s32.totalorder %s18, 2
      %p141 = scmp.ne.s32.totalorder %s136, %s138
      %p142 = scmp.eq.s32.totalorder %s18, 0
      %p143 = por %p141, %p142
      %p144 = scmp.ne.s32.totalorder %s136, %s138
      %p145 = scmp.eq.s32.totalorder %s23, 2
      %p146 = por %p144, %p145
      %p147 = scmp.ne.s32.totalorder %s138, %s139
      %p148 = scmp.eq.s32.totalorder %s23, 0
      %p149 = por %p147, %p148
      %p150 = scmp.ne.s32.totalorder %s138, %s139
      %p151 = scmp.eq.s32.totalorder %s24, 2
      %p152 = por %p150, %p151
      %p154 = scmp.ne.s32.totalorder %s139, %s153
      %p155 = scmp.eq.s32.totalorder %s24, 0
      %p156 = por %p154, %p155
      %s158 = sadd.s32 %s157, 1
      %p161 = scmp.eq.s32.totalorder %s18, 2
      %p162 = scmp.ne.s32.totalorder %s157, %s159
      %p163 = scmp.eq.s32.totalorder %s18, 0
      %p164 = por %p162, %p163
      %p165 = scmp.ne.s32.totalorder %s157, %s159
      %p166 = scmp.eq.s32.totalorder %s23, 2
      %p167 = por %p165, %p166
      %p168 = scmp.ne.s32.totalorder %s159, %s160
      %p169 = scmp.eq.s32.totalorder %s23, 0
      %p170 = por %p168, %p169
      %p171 = scmp.ne.s32.totalorder %s159, %s160
      %p172 = scmp.eq.s32.totalorder %s24, 2
      %p173 = por %p171, %p172
      %p175 = scmp.ne.s32.totalorder %s160, %s174
      %p176 = scmp.eq.s32.totalorder %s24, 0
      %p177 = por %p175, %p176
      %s179 = sadd.s32 %s178, 1
      %p182 = scmp.eq.s32.totalorder %s18, 2
      %p183 = scmp.ne.s32.totalorder %s178, %s180
      %p184 = scmp.eq.s32.totalorder %s18, 0
      %p185 = por %p183, %p184
      %p186 = scmp.ne.s32.totalorder %s178, %s180
      %p187 = scmp.eq.s32.totalorder %s23, 2
      %p188 = por %p186, %p187
      %p189 = scmp.ne.s32.totalorder %s180, %s181
      %p190 = scmp.eq.s32.totalorder %s23, 0
      %p191 = por %p189, %p190
      %p192 = scmp.ne.s32.totalorder %s180, %s181
      %p193 = scmp.eq.s32.totalorder %s24, 2
      %p194 = por %p192, %p193
      %p196 = scmp.ne.s32.totalorder %s181, %s195
      %p197 = scmp.eq.s32.totalorder %s24, 0
      %p198 = por %p196, %p197
      %s200 = sadd.s32 %s199, 1
      %p203 = scmp.eq.s32.totalorder %s18, 2
      %p204 = scmp.ne.s32.totalorder %s199, %s201
      %p205 = scmp.eq.s32.totalorder %s18, 0
      %p206 = por %p204, %p205
      %p207 = scmp.ne.s32.totalorder %s199, %s201
      %p208 = scmp.eq.s32.totalorder %s23, 2
      %p209 = por %p207, %p208
      %p210 = scmp.ne.s32.totalorder %s201, %s202
      %p211 = scmp.eq.s32.totalorder %s23, 0
      %p212 = por %p210, %p211
      %p213 = scmp.ne.s32.totalorder %s201, %s202
      %p214 = scmp.eq.s32.totalorder %s24, 2
      %p215 = por %p213, %p214
      %p217 = scmp.ne.s32.totalorder %s202, %s216
      %p218 = scmp.eq.s32.totalorder %s24, 0
      %p219 = por %p217, %p218
      %s220 = ssub.s32 %s18, %s25
      %p221 = scmp.eq.s32.totalorder %s220, 0
      %s223 = sadd.s32 %s222, 1
      %s224 = scalar_select %p221, %s222, %s223
      %p227 = pneg %p221
      %p228 = scmp.eq.s32.totalorder %s18, 2
      %p229 = por %p227, %p228
      %p230 = scmp.ne.s32.totalorder %s222, %s225
      %p231 = scmp.eq.s32.totalorder %s18, 0
      %p232 = por %p230, %p231
      %p233 = scmp.ne.s32.totalorder %s222, %s225
      %p234 = scmp.eq.s32.totalorder %s23, 2
      %p235 = por %p233, %p234
      %p236 = scmp.ne.s32.totalorder %s225, %s226
      %p237 = scmp.eq.s32.totalorder %s23, 0
      %p238 = por %p236, %p237
      %p239 = scmp.ne.s32.totalorder %s225, %s226
      %p240 = scmp.eq.s32.totalorder %s24, 2
      %p241 = por %p239, %p240
      %p243 = scmp.ne.s32.totalorder %s226, %s242
      %p244 = scmp.eq.s32.totalorder %s24, 0
      %p245 = por %p243, %p244
      %p246 = scmp.le.s32.totalorder 1, %s18
      %p247 = scmp.lt.s32.totalorder %s18, 4
      %p248 = pnand %p246, %p247
      %p249 = pneg %p248
      // Predicated region
      $region9: #{tpu_custom_call.1} parent=5 // pred_check
        _
      $region10: #{tpu_custom_call.1} parent=5 // pred_check_branch
        %251 = sbr.rel (%p248) target = $region12
      $region11: #{tpu_custom_call.1} parent=5 // pred_region
        %s252 = ssub.s32 %s18, 1
        // Predicated region
        $region13: #{tpu_custom_call.1} parent=11 // pred_check
          %p253 = pneg %p65
        $region14: #{tpu_custom_call.1} parent=11 // pred_check_branch
          %255 = sbr.rel (%p253) target = $region16
        $region15: #{tpu_custom_call.1} parent=11 // pred_region
          _
        $region16: #{tpu_custom_call.1} parent=11 // pred_fallthru
          _
        // Predicated region
        $region17: #{tpu_custom_call.1} parent=11 // pred_check
          %p256 = pneg %p86
        $region18: #{tpu_custom_call.1} parent=11 // pred_check_branch
          %258 = sbr.rel (%p256) target = $region20
        $region19: #{tpu_custom_call.1} parent=11 // pred_region
          _
        $region20: #{tpu_custom_call.1} parent=11 // pred_fallthru
          _
        // Predicated region
        $region21: #{tpu_custom_call.1} parent=11 // pred_check
          %p259 = pneg %p107
        $region22: #{tpu_custom_call.1} parent=11 // pred_check_branch
          %261 = sbr.rel (%p259) target = $region24
        $region23: #{tpu_custom_call.1} parent=11 // pred_region
          _
        $region24: #{tpu_custom_call.1} parent=11 // pred_fallthru
          _
        // Predicated region
        $region25: #{tpu_custom_call.1} parent=11 // pred_check
          %p262 = pneg %p128
        $region26: #{tpu_custom_call.1} parent=11 // pred_check_branch
          %264 = sbr.rel (%p262) target = $region28
        $region27: #{tpu_custom_call.1} parent=11 // pred_region
          _
        $region28: #{tpu_custom_call.1} parent=11 // pred_fallthru
          _
        // Predicated region
        $region29: #{tpu_custom_call.1} parent=11 // pred_check
          %p265 = pneg %p149
        $region30: #{tpu_custom_call.1} parent=11 // pred_check_branch
          %267 = sbr.rel (%p265) target = $region32
        $region31: #{tpu_custom_call.1} parent=11 // pred_region
          _
        $region32: #{tpu_custom_call.1} parent=11 // pred_fallthru
          _
        // Predicated region
        $region33: #{tpu_custom_call.1} parent=11 // pred_check
          %p268 = pneg %p170
        $region34: #{tpu_custom_call.1} parent=11 // pred_check_branch
          %270 = sbr.rel (%p268) target = $region36
        $region35: #{tpu_custom_call.1} parent=11 // pred_region
          _
        $region36: #{tpu_custom_call.1} parent=11 // pred_fallthru
          _
        // Predicated region
        $region37: #{tpu_custom_call.1} parent=11 // pred_check
          %p271 = pneg %p191
        $region38: #{tpu_custom_call.1} parent=11 // pred_check_branch
          %273 = sbr.rel (%p271) target = $region40
        $region39: #{tpu_custom_call.1} parent=11 // pred_region
          _
        $region40: #{tpu_custom_call.1} parent=11 // pred_fallthru
          _
        // Predicated region
        $region41: #{tpu_custom_call.1} parent=11 // pred_check
          %p274 = pneg %p212
        $region42: #{tpu_custom_call.1} parent=11 // pred_check_branch
          %276 = sbr.rel (%p274) target = $region44
        $region43: #{tpu_custom_call.1} parent=11 // pred_region
          _
        $region44: #{tpu_custom_call.1} parent=11 // pred_fallthru
          _
      $region12: #{tpu_custom_call.1} parent=5 // pred_fallthru
        _
      %p277 = scmp.lt.s32.totalorder %s18, 3
      // Predicated region
      $region45: #{tpu_custom_call.1} parent=5 // pred_check
        %p278 = pneg %p277
      $region46: #{tpu_custom_call.1} parent=5 // pred_check_branch
        %280 = sbr.rel (%p278) target = $region48
      $region47: #{tpu_custom_call.1} parent=5 // pred_region
        // Predicated region
        $region49: #{tpu_custom_call.1} parent=47 // pred_check
          %p281 = pneg %p38
        $region50: #{tpu_custom_call.1} parent=47 // pred_check_branch
          %283 = sbr.rel (%p281) target = $region52
        $region51: #{tpu_custom_call.1} parent=47 // pred_region
          %s284 = smul.u32 64, %s18
          %p285 = scmp.lt.s32.totalorder %s284, 191
          %s286 = scalar_select %p285, %s284, 191
          %s287 = smul.addr %s286, 8
          %s288 = scalar_lea.vmem %s0, %s287
          %s289 = smul.u32 64, %s18
        $region52: #{tpu_custom_call.1} parent=47 // pred_fallthru
          _
      $region48: #{tpu_custom_call.1} parent=5 // pred_fallthru
        _
      %p290 = scmp.le.s32.totalorder 1, %s18
      %p291 = scmp.lt.s32.totalorder %s18, 4
      %p292 = pnand %p290, %p291
      %p293 = pneg %p292
      // Predicated region
      $region53: #{tpu_custom_call.1} parent=5 // pred_check
        _
      $region54: #{tpu_custom_call.1} parent=5 // pred_check_branch
        %295 = sbr.rel (%p292) target = $region56
      $region55: #{tpu_custom_call.1} parent=5 // pred_region
        %s296 = ssub.s32 %s18, 1
        %s297 = smul.u32 64, %s23
        %p298 = scmp.lt.s32.totalorder %s297, 191
        %s299 = scalar_select %p298, %s297, 191
        %s300 = smul.addr %s299, 8
        %s301 = scalar_lea.vmem %s0, %s300
        %p302 = pneg %p44
        %p303 = pneg %p41
        %p304 = pneg %p65
        %p305 = pneg %p62
        %p306 = pneg %p86
        %p307 = pneg %p83
        %p308 = pneg %p107
        %p309 = pneg %p104
        %p310 = pneg %p128
        %p311 = pneg %p125
        %p312 = pneg %p149
        %p313 = pneg %p146
        %p314 = pneg %p170
        %p315 = pneg %p167
        %p316 = pneg %p191
        %p317 = pneg %p188
        %p318 = pneg %p212
        %p319 = pneg %p209
        %p320 = pneg %p238
        %p321 = pneg %p235
        %s322 = sand.u32 %s225, 1
        %s323 = scalar_lea.sflag [#allocation3], %s322
        %s324 = sand.u32 %s225, 1
        %s325 = smul.addr %s324, 16
        %s326 = scalar_lea.vmem [#allocation2], %s325
        %s327 = smul.u32 64, %s23
        %p328 = scmp.lt.s32.totalorder %s327, 191
        %s329 = scalar_select %p328, %s327, 191
        %s330 = smul.addr %s329, 8
        %s331 = scalar_lea.vmem %s0, %s330
        %s332 = smul.u32 64, %s23
        %s333 = smul.u32 4, %s23
        %v334 = vld [vmem:[%s331] sm:$0xff]
        %v335 = vld [vmem:[%s331 + $0x8] sm:$0xff]
        %v336 = vld [vmem:[%s331 + $0x10] sm:$0xff]
        %v337 = vld [vmem:[%s331 + $0x18] sm:$0xff]
        %v338 = vld [vmem:[%s331 + $0x20] sm:$0xff]
        %v339 = vld [vmem:[%s331 + $0x28] sm:$0xff]
        %v340 = vld [vmem:[%s331 + $0x30] sm:$0xff]
        %v341 = vld [vmem:[%s331 + $0x38] sm:$0xff]
        %v342 = vld [vmem:[%s331 + $0x40] sm:$0xff]
        %v343 = vld [vmem:[%s331 + $0x48] sm:$0xff]
        %v344 = vld [vmem:[%s331 + $0x50] sm:$0xff]
        %v345 = vld [vmem:[%s331 + $0x58] sm:$0xff]
        %v346 = vld [vmem:[%s331 + $0x60] sm:$0xff]
        %v347 = vld [vmem:[%s331 + $0x68] sm:$0xff]
        %v348 = vld [vmem:[%s331 + $0x70] sm:$0xff]
        %v349 = vld [vmem:[%s331 + $0x78] sm:$0xff]
        %v350 = vld [vmem:[%s331 + $0x80] sm:$0xff]
        %v351 = vld [vmem:[%s331 + $0x88] sm:$0xff]
        %v352 = vld [vmem:[%s331 + $0x90] sm:$0xff]
        %v353 = vld [vmem:[%s331 + $0x98] sm:$0xff]
        %v354 = vld [vmem:[%s331 + $0xa0] sm:$0xff]
        %v355 = vld [vmem:[%s331 + $0xa8] sm:$0xff]
        %v356 = vld [vmem:[%s331 + $0xb0] sm:$0xff]
        %v357 = vld [vmem:[%s331 + $0xb8] sm:$0xff]
        %v358 = vld [vmem:[%s331 + $0xc0] sm:$0xff]
        %v359 = vld [vmem:[%s331 + $0xc8] sm:$0xff]
        %v360 = vld [vmem:[%s331 + $0xd0] sm:$0xff]
        %v361 = vld [vmem:[%s331 + $0xd8] sm:$0xff]
        %v362 = vld [vmem:[%s331 + $0xe0] sm:$0xff]
        %v363 = vld [vmem:[%s331 + $0xe8] sm:$0xff]
        %v364 = vld [vmem:[%s331 + $0xf0] sm:$0xff]
        %v365 = vld [vmem:[%s331 + $0xf8] sm:$0xff]
        %v366 = vld [vmem:[%s331 + $0x100] sm:$0xff]
        %v367 = vld [vmem:[%s331 + $0x108] sm:$0xff]
        %v368 = vld [vmem:[%s331 + $0x110] sm:$0xff]
        %v369 = vld [vmem:[%s331 + $0x118] sm:$0xff]
        %v370 = vld [vmem:[%s331 + $0x120] sm:$0xff]
        %v371 = vld [vmem:[%s331 + $0x128] sm:$0xff]
        %v372 = vld [vmem:[%s331 + $0x130] sm:$0xff]
        %v373 = vld [vmem:[%s331 + $0x138] sm:$0xff]
        %v374 = vld [vmem:[%s331 + $0x140] sm:$0xff]
        %v375 = vld [vmem:[%s331 + $0x148] sm:$0xff]
        %v376 = vld [vmem:[%s331 + $0x150] sm:$0xff]
        %v377 = vld [vmem:[%s331 + $0x158] sm:$0xff]
        %v378 = vld [vmem:[%s331 + $0x160] sm:$0xff]
        %v379 = vld [vmem:[%s331 + $0x168] sm:$0xff]
        %v380 = vld [vmem:[%s331 + $0x170] sm:$0xff]
        %v381 = vld [vmem:[%s331 + $0x178] sm:$0xff]
        %v382 = vld [vmem:[%s331 + $0x180] sm:$0xff]
        %v383 = vld [vmem:[%s331 + $0x188] sm:$0xff]
        %v384 = vld [vmem:[%s331 + $0x190] sm:$0xff]
        %v385 = vld [vmem:[%s331 + $0x198] sm:$0xff]
        %v386 = vld [vmem:[%s331 + $0x1a0] sm:$0xff]
        %v387 = vld [vmem:[%s331 + $0x1a8] sm:$0xff]
        %v388 = vld [vmem:[%s331 + $0x1b0] sm:$0xff]
        %v389 = vld [vmem:[%s331 + $0x1b8] sm:$0xff]
        %v390 = vld [vmem:[%s331 + $0x1c0] sm:$0xff]
        %v391 = vld [vmem:[%s331 + $0x1c8] sm:$0xff]
        %v392 = vld [vmem:[%s331 + $0x1d0] sm:$0xff]
        %v393 = vld [vmem:[%s331 + $0x1d8] sm:$0xff]
        %v394 = vld [vmem:[%s331 + $0x1e0] sm:$0xff]
        %v395 = vld [vmem:[%s331 + $0x1e8] sm:$0xff]
        %v396 = vld [vmem:[%s331 + $0x1f0] sm:$0xff]
        %v397 = vld [vmem:[%s331 + $0x1f8] sm:$0xff]
        %v398 = vld [vmem:[%s1] sm:$0xff]
        %v399 = vld [vmem:[%s1 + $0x8] sm:$0xff]
        %v400 = vld [vmem:[%s1 + $0x10] sm:$0xff]
        %v401 = vld [vmem:[%s1 + $0x18] sm:$0xff]
        %v402 = vld [vmem:[%s2] sm:$0xff]
        %v403 = vld [vmem:[%s2 + $0x8] sm:$0xff]
        %v404 = vld [vmem:[%s2 + $0x10] sm:$0xff]
        %v405 = vld [vmem:[%s2 + $0x18] sm:$0xff]
        %407 = vset.pattern.permute.xlu0 0
        %408 = vperm.xlu0 %407, %v402
        %v409 = vpop.permute.xlu0 %408
        %412 = vset.pattern.permute.xlu0 0
        %413 = vperm.xlu0 %412, %v403
        %v414 = vpop.permute.xlu0 %413
        %417 = vset.pattern.permute.xlu0 0
        %418 = vperm.xlu0 %417, %v404
        %v419 = vpop.permute.xlu0 %418
        %422 = vset.pattern.permute.xlu0 0
        %423 = vperm.xlu0 %422, %v405
        %v424 = vpop.permute.xlu0 %423
        %vm426 = vcmask 64512
        %v428 = vsel %vm426, %v398, 0
        %v431 = vsel %vm426, %v399, 0
        %v434 = vsel %vm426, %v400, 0
        %v437 = vsel %vm426, %v401, 0
        %v440 = vsel %vm426, %v334, 0
        %v443 = vsel %vm426, %v335, 0
        %v446 = vsel %vm426, %v336, 0
        %v449 = vsel %vm426, %v337, 0
        %v452 = vsel %vm426, %v338, 0
        %v455 = vsel %vm426, %v339, 0
        %v458 = vsel %vm426, %v340, 0
        %v461 = vsel %vm426, %v341, 0
        %v464 = vsel %vm426, %v342, 0
        %v467 = vsel %vm426, %v343, 0
        %v470 = vsel %vm426, %v344, 0
        %v473 = vsel %vm426, %v345, 0
        %v476 = vsel %vm426, %v346, 0
        %v479 = vsel %vm426, %v347, 0
        %v482 = vsel %vm426, %v348, 0
        %v485 = vsel %vm426, %v349, 0
        %v488 = vsel %vm426, %v350, 0
        %v491 = vsel %vm426, %v351, 0
        %v494 = vsel %vm426, %v352, 0
        %v497 = vsel %vm426, %v353, 0
        %v500 = vsel %vm426, %v354, 0
        %v503 = vsel %vm426, %v355, 0
        %v506 = vsel %vm426, %v356, 0
        %v509 = vsel %vm426, %v357, 0
        %v512 = vsel %vm426, %v358, 0
        %v515 = vsel %vm426, %v359, 0
        %v518 = vsel %vm426, %v360, 0
        %v521 = vsel %vm426, %v361, 0
        %v524 = vsel %vm426, %v362, 0
        %v527 = vsel %vm426, %v363, 0
        %v530 = vsel %vm426, %v364, 0
        %v533 = vsel %vm426, %v365, 0
        %v536 = vsel %vm426, %v366, 0
        %v539 = vsel %vm426, %v367, 0
        %v542 = vsel %vm426, %v368, 0
        %v545 = vsel %vm426, %v369, 0
        %v548 = vsel %vm426, %v370, 0
        %v551 = vsel %vm426, %v371, 0
        %v554 = vsel %vm426, %v372, 0
        %v557 = vsel %vm426, %v373, 0
        %v560 = vsel %vm426, %v374, 0
        %v563 = vsel %vm426, %v375, 0
        %v566 = vsel %vm426, %v376, 0
        %v569 = vsel %vm426, %v377, 0
        %v572 = vsel %vm426, %v378, 0
        %v575 = vsel %vm426, %v379, 0
        %v578 = vsel %vm426, %v380, 0
        %v581 = vsel %vm426, %v381, 0
        %v584 = vsel %vm426, %v382, 0
        %v587 = vsel %vm426, %v383, 0
        %v590 = vsel %vm426, %v384, 0
        %v593 = vsel %vm426, %v385, 0
        %v596 = vsel %vm426, %v386, 0
        %v599 = vsel %vm426, %v387, 0
        %v602 = vsel %vm426, %v388, 0
        %v605 = vsel %vm426, %v389, 0
        %v608 = vsel %vm426, %v390, 0
        %v611 = vsel %vm426, %v391, 0
        %v614 = vsel %vm426, %v392, 0
        %v617 = vsel %vm426, %v393, 0
        %v620 = vsel %vm426, %v394, 0
        %v623 = vsel %vm426, %v395, 0
        %v626 = vsel %vm426, %v396, 0
        %v629 = vsel %vm426, %v397, 0
        %631 = vmatprep.subr.mxu0 0.0
        %632 = vmatpush1.xpose.msra.mxu0 %v485
        %633 = vmatprep.subr.mxu0 0.0
        %634 = vmatpush1.xpose.msra.mxu0 %v482
        %635 = vmatprep.subr.mxu0 0.0
        %636 = vmatpush1.xpose.msra.mxu0 %v479
        %637 = vmatprep.subr.mxu0 0.0
        %638 = vmatpush1.xpose.msra.mxu0 %v476
        %639 = vmatprep.subr.mxu0 0.0
        %640 = vmatpush1.xpose.msra.mxu0 %v473
        %641 = vmatprep.subr.mxu0 0.0
        %642 = vmatpush1.xpose.msra.mxu0 %v470
        %643 = vmatprep.subr.mxu0 0.0
        %644 = vmatpush1.xpose.msra.mxu0 %v467
        %645 = vmatprep.subr.mxu0 0.0
        %646 = vmatpush1.xpose.msra.mxu0 %v464
        %647 = vmatprep.subr.mxu0 0.0
        %648 = vmatpush1.xpose.msra.mxu0 %v461
        %649 = vmatprep.subr.mxu0 0.0
        %650 = vmatpush1.xpose.msra.mxu0 %v458
        %651 = vmatprep.subr.mxu0 0.0
        %652 = vmatpush1.xpose.msra.mxu0 %v455
        %653 = vmatprep.subr.mxu0 0.0
        %654 = vmatpush1.xpose.msra.mxu0 %v452
        %655 = vmatprep.subr.mxu0 0.0
        %656 = vmatpush1.xpose.msra.mxu0 %v449
        %657 = vmatprep.subr.mxu0 0.0
        %658 = vmatpush1.xpose.msra.mxu0 %v446
        %659 = vmatprep.subr.mxu0 0.0
        %660 = vmatpush1.xpose.msra.mxu0 %v443
        %661 = vmatprep.subr.mxu0 0.0
        %662 = vmatpush1.xpose.msra.mxu0 %v440
        %663 = vmatprep.subr.mxu0 0.0
        %664 = vmatpush2.xpose.msra.mxu0 %v533
        %665 = vmatprep.subr.mxu0 0.0
        %666 = vmatpush2.xpose.msra.mxu0 %v530
        %667 = vmatprep.subr.mxu0 0.0
        %668 = vmatpush2.xpose.msra.mxu0 %v527
        %669 = vmatprep.subr.mxu0 0.0
        %670 = vmatpush2.xpose.msra.mxu0 %v524
        %671 = vmatprep.subr.mxu0 0.0
        %672 = vmatpush2.xpose.msra.mxu0 %v521
        %673 = vmatprep.subr.mxu0 0.0
        %674 = vmatpush2.xpose.msra.mxu0 %v518
        %675 = vmatprep.subr.mxu0 0.0
        %676 = vmatpush2.xpose.msra.mxu0 %v515
        %677 = vmatprep.subr.mxu0 0.0
        %678 = vmatpush2.xpose.msra.mxu0 %v512
        %679 = vmatprep.subr.mxu0 0.0
        %680 = vmatpush2.xpose.msra.mxu0 %v509
        %681 = vmatprep.subr.mxu0 0.0
        %682 = vmatpush2.xpose.msra.mxu0 %v506
        %683 = vmatprep.subr.mxu0 0.0
        %684 = vmatpush2.xpose.msra.mxu0 %v503
        %685 = vmatprep.subr.mxu0 0.0
        %686 = vmatpush2.xpose.msra.mxu0 %v500
        %687 = vmatprep.subr.mxu0 0.0
        %688 = vmatpush2.xpose.msra.mxu0 %v497
        %689 = vmatprep.subr.mxu0 0.0
        %690 = vmatpush2.xpose.msra.mxu0 %v494
        %691 = vmatprep.subr.mxu0 0.0
        %692 = vmatpush2.xpose.msra.mxu0 %v491
        %693 = vmatprep.subr.mxu0 0.0
        %694 = vmatpush2.xpose.msra.mxu0 %v488
        %695 = vmatprep.mubr.f32.mxu0 0.0
        %696 = vmatmul.mubr.f32.gmra.mxu0 %v428
        %v697 = vpop.f32.mrf.mxu0
        %v698 = vadd.f32 %v409, %v697
        %v699 = vpop.f32.mrf.mxu0
        %v700 = vadd.f32 %v409, %v699
        %701 = vmatprep.mubr.f32.mxu0 0.0
        %702 = vmatmul.mubr.f32.gmra.mxu0 %v431
        %v703 = vpop.f32.mrf.mxu0
        %v704 = vadd.f32 %v414, %v703
        %v705 = vpop.f32.mrf.mxu0
        %v706 = vadd.f32 %v414, %v705
        %707 = vmatprep.mubr.f32.mxu0 0.0
        %708 = vmatmul.mubr.f32.gmra.mxu0 %v434
        %v709 = vpop.f32.mrf.mxu0
        %v710 = vadd.f32 %v419, %v709
        %v711 = vpop.f32.mrf.mxu0
        %v712 = vadd.f32 %v419, %v711
        %713 = vmatprep.mubr.f32.mxu0 0.0
        %714 = vmatmul.mubr.f32.gmra.mxu0 %v437
        %v715 = vpop.f32.mrf.mxu0
        %v716 = vadd.f32 %v424, %v715
        %v717 = vpop.f32.mrf.mxu0
        %v718 = vadd.f32 %v424, %v717
        %719 = vdwg.mxu0
        %720 = vmatprep.subr.mxu0 0.0
        %721 = vmatpush1.xpose.msra.mxu0 %v581
        %722 = vmatprep.subr.mxu0 0.0
        %723 = vmatpush1.xpose.msra.mxu0 %v578
        %724 = vmatprep.subr.mxu0 0.0
        %725 = vmatpush1.xpose.msra.mxu0 %v575
        %726 = vmatprep.subr.mxu0 0.0
        %727 = vmatpush1.xpose.msra.mxu0 %v572
        %728 = vmatprep.subr.mxu0 0.0
        %729 = vmatpush1.xpose.msra.mxu0 %v569
        %730 = vmatprep.subr.mxu0 0.0
        %731 = vmatpush1.xpose.msra.mxu0 %v566
        %732 = vmatprep.subr.mxu0 0.0
        %733 = vmatpush1.xpose.msra.mxu0 %v563
        %734 = vmatprep.subr.mxu0 0.0
        %735 = vmatpush1.xpose.msra.mxu0 %v560
        %736 = vmatprep.subr.mxu0 0.0
        %737 = vmatpush1.xpose.msra.mxu0 %v557
        %738 = vmatprep.subr.mxu0 0.0
        %739 = vmatpush1.xpose.msra.mxu0 %v554
        %740 = vmatprep.subr.mxu0 0.0
        %741 = vmatpush1.xpose.msra.mxu0 %v551
        %742 = vmatprep.subr.mxu0 0.0
        %743 = vmatpush1.xpose.msra.mxu0 %v548
        %744 = vmatprep.subr.mxu0 0.0
        %745 = vmatpush1.xpose.msra.mxu0 %v545
        %746 = vmatprep.subr.mxu0 0.0
        %747 = vmatpush1.xpose.msra.mxu0 %v542
        %748 = vmatprep.subr.mxu0 0.0
        %749 = vmatpush1.xpose.msra.mxu0 %v539
        %750 = vmatprep.subr.mxu0 0.0
        %751 = vmatpush1.xpose.msra.mxu0 %v536
        %752 = vmatprep.subr.mxu0 0.0
        %753 = vmatpush2.xpose.msra.mxu0 %v629
        %754 = vmatprep.subr.mxu0 0.0
        %755 = vmatpush2.xpose.msra.mxu0 %v626
        %756 = vmatprep.subr.mxu0 0.0
        %757 = vmatpush2.xpose.msra.mxu0 %v623
        %758 = vmatprep.subr.mxu0 0.0
        %759 = vmatpush2.xpose.msra.mxu0 %v620
        %760 = vmatprep.subr.mxu0 0.0
        %761 = vmatpush2.xpose.msra.mxu0 %v617
        %762 = vmatprep.subr.mxu0 0.0
        %763 = vmatpush2.xpose.msra.mxu0 %v614
        %764 = vmatprep.subr.mxu0 0.0
        %765 = vmatpush2.xpose.msra.mxu0 %v611
        %766 = vmatprep.subr.mxu0 0.0
        %767 = vmatpush2.xpose.msra.mxu0 %v608
        %768 = vmatprep.subr.mxu0 0.0
        %769 = vmatpush2.xpose.msra.mxu0 %v605
        %770 = vmatprep.subr.mxu0 0.0
        %771 = vmatpush2.xpose.msra.mxu0 %v602
        %772 = vmatprep.subr.mxu0 0.0
        %773 = vmatpush2.xpose.msra.mxu0 %v599
        %774 = vmatprep.subr.mxu0 0.0
        %775 = vmatpush2.xpose.msra.mxu0 %v596
        %776 = vmatprep.subr.mxu0 0.0
        %777 = vmatpush2.xpose.msra.mxu0 %v593
        %778 = vmatprep.subr.mxu0 0.0
        %779 = vmatpush2.xpose.msra.mxu0 %v590
        %780 = vmatprep.subr.mxu0 0.0
        %781 = vmatpush2.xpose.msra.mxu0 %v587
        %782 = vmatprep.subr.mxu0 0.0
        %783 = vmatpush2.xpose.msra.mxu0 %v584
        %784 = vmatprep.mubr.f32.mxu0 0.0
        %785 = vmatmul.mubr.f32.gmra.mxu0 %v428
        %v786 = vpop.f32.mrf.mxu0
        %v787 = vadd.f32 %v409, %v786
        %v788 = vpop.f32.mrf.mxu0
        %v789 = vadd.f32 %v409, %v788
        %790 = vmatprep.mubr.f32.mxu0 0.0
        %791 = vmatmul.mubr.f32.gmra.mxu0 %v431
        %v792 = vpop.f32.mrf.mxu0
        %v793 = vadd.f32 %v414, %v792
        %v794 = vpop.f32.mrf.mxu0
        %v795 = vadd.f32 %v414, %v794
        %796 = vmatprep.mubr.f32.mxu0 0.0
        %797 = vmatmul.mubr.f32.gmra.mxu0 %v434
        %v798 = vpop.f32.mrf.mxu0
        %v799 = vadd.f32 %v419, %v798
        %v800 = vpop.f32.mrf.mxu0
        %v801 = vadd.f32 %v419, %v800
        %802 = vmatprep.mubr.f32.mxu0 0.0
        %803 = vmatmul.mubr.f32.gmra.mxu0 %v437
        %v804 = vpop.f32.mrf.mxu0
        %v805 = vadd.f32 %v424, %v804
        %v806 = vpop.f32.mrf.mxu0
        %v807 = vadd.f32 %v424, %v806
        %808 = vdwg.mxu0
        %v809 = vmax.f32 %v698, 0.0
        %v810 = vmax.f32 %v700, 0.0
        %v811 = vmax.f32 %v787, 0.0
        %v812 = vmax.f32 %v789, 0.0
        %v813 = vmax.f32 %v704, 0.0
        %v814 = vmax.f32 %v706, 0.0
        %v815 = vmax.f32 %v793, 0.0
        %v816 = vmax.f32 %v795, 0.0
        %v817 = vmax.f32 %v710, 0.0
        %v818 = vmax.f32 %v712, 0.0
        %v819 = vmax.f32 %v799, 0.0
        %v820 = vmax.f32 %v801, 0.0
        %v821 = vmax.f32 %v716, 0.0
        %v822 = vmax.f32 %v718, 0.0
        %v823 = vmax.f32 %v805, 0.0
        %v824 = vmax.f32 %v807, 0.0
        %v825 = vld [vmem:[%s3] sm:$0xff]
        %v826 = vld [vmem:[%s3 + $0x8] sm:$0xff]
        %v827 = vld [vmem:[%s3 + $0x10] sm:$0xff]
        %v828 = vld [vmem:[%s3 + $0x18] sm:$0xff]
        %v829 = vld [vmem:[%s4] sm:$0xff]
        %v830 = vld [vmem:[%s4 + $0x8] sm:$0xff]
        %v831 = vld [vmem:[%s4 + $0x10] sm:$0xff]
        %v832 = vld [vmem:[%s4 + $0x18] sm:$0xff]
        %834 = vset.pattern.permute.xlu0 0
        %835 = vperm.xlu0 %834, %v829
        %v836 = vpop.permute.xlu0 %835
        %839 = vset.pattern.permute.xlu0 0
        %840 = vperm.xlu0 %839, %v830
        %v841 = vpop.permute.xlu0 %840
        %844 = vset.pattern.permute.xlu0 0
        %845 = vperm.xlu0 %844, %v831
        %v846 = vpop.permute.xlu0 %845
        %849 = vset.pattern.permute.xlu0 0
        %850 = vperm.xlu0 %849, %v832
        %v851 = vpop.permute.xlu0 %850
        %vm853 = vcmask 261120
        %v855 = vsel %vm853, %v825, 0
        %v858 = vsel %vm853, %v826, 0
        %v861 = vsel %vm853, %v827, 0
        %v864 = vsel %vm853, %v828, 0
        %866 = vmatprep.subr.mxu0 0.0
        %867 = vmatpush1.msra.mxu0 0.0
        %868 = vmatprep.subr.mxu0 0.0
        %869 = vmatpush1.msra.mxu0 0.0
        %870 = vmatprep.subr.mxu0 0.0
        %871 = vmatpush1.msra.mxu0 0.0
        %872 = vmatprep.subr.mxu0 0.0
        %873 = vmatpush1.msra.mxu0 0.0
        %874 = vmatprep.subr.mxu0 0.0
        %875 = vmatpush1.msra.mxu0 0.0
        %876 = vmatprep.subr.mxu0 0.0
        %877 = vmatpush1.msra.mxu0 0.0
        %878 = vmatprep.subr.mxu0 0.0
        %879 = vmatpush1.msra.mxu0 0.0
        %880 = vmatprep.subr.mxu0 0.0
        %881 = vmatpush1.msra.mxu0 0.0
        %882 = vmatprep.subr.mxu0 0.0
        %883 = vmatpush1.msra.mxu0 0.0
        %884 = vmatprep.subr.mxu0 0.0
        %885 = vmatpush1.msra.mxu0 0.0
        %886 = vmatprep.subr.mxu0 0.0
        %887 = vmatpush1.msra.mxu0 0.0
        %888 = vmatprep.subr.mxu0 0.0
        %889 = vmatpush1.msra.mxu0 0.0
        %890 = vmatprep.subr.mxu0 %v822
        %891 = vmatpush1.msra.mxu0 %v821
        %892 = vmatprep.subr.mxu0 %v818
        %893 = vmatpush1.msra.mxu0 %v817
        %894 = vmatprep.subr.mxu0 %v814
        %895 = vmatpush1.msra.mxu0 %v813
        %896 = vmatprep.subr.mxu0 %v810
        %897 = vmatpush1.msra.mxu0 %v809
        %898 = vmatprep.subr.mxu0 0.0
        %899 = vmatpush2.msra.mxu0 0.0
        %900 = vmatprep.subr.mxu0 0.0
        %901 = vmatpush2.msra.mxu0 0.0
        %902 = vmatprep.subr.mxu0 0.0
        %903 = vmatpush2.msra.mxu0 0.0
        %904 = vmatprep.subr.mxu0 0.0
        %905 = vmatpush2.msra.mxu0 0.0
        %906 = vmatprep.subr.mxu0 0.0
        %907 = vmatpush2.msra.mxu0 0.0
        %908 = vmatprep.subr.mxu0 0.0
        %909 = vmatpush2.msra.mxu0 0.0
        %910 = vmatprep.subr.mxu0 0.0
        %911 = vmatpush2.msra.mxu0 0.0
        %912 = vmatprep.subr.mxu0 0.0
        %913 = vmatpush2.msra.mxu0 0.0
        %914 = vmatprep.subr.mxu0 0.0
        %915 = vmatpush2.msra.mxu0 0.0
        %916 = vmatprep.subr.mxu0 0.0
        %917 = vmatpush2.msra.mxu0 0.0
        %918 = vmatprep.subr.mxu0 0.0
        %919 = vmatpush2.msra.mxu0 0.0
        %920 = vmatprep.subr.mxu0 0.0
        %921 = vmatpush2.msra.mxu0 0.0
        %922 = vmatprep.subr.mxu0 0.0
        %923 = vmatpush2.msra.mxu0 0.0
        %924 = vmatprep.subr.mxu0 0.0
        %925 = vmatpush2.msra.mxu0 0.0
        %926 = vmatprep.subr.mxu0 0.0
        %927 = vmatpush2.msra.mxu0 0.0
        %928 = vmatprep.subr.mxu0 0.0
        %929 = vmatpush2.msra.mxu0 0.0
        %930 = vmatprep.mubr.f32.mxu0 0.0
        %931 = vmatmul.mubr.f32.gmra.mxu0 %v855
        %v932 = vpop.f32.mrf.mxu0
        %v933 = vadd.f32 %v836, %v932
        %v934 = vpop.f32.mrf.mxu0
        %v935 = vadd.f32 %v836, %v934
        %936 = vmatprep.mubr.f32.mxu0 0.0
        %937 = vmatmul.mubr.f32.gmra.mxu0 %v858
        %v938 = vpop.f32.mrf.mxu0
        %v939 = vadd.f32 %v841, %v938
        %v940 = vpop.f32.mrf.mxu0
        %v941 = vadd.f32 %v841, %v940
        %942 = vmatprep.mubr.f32.mxu0 0.0
        %943 = vmatmul.mubr.f32.gmra.mxu0 %v861
        %v944 = vpop.f32.mrf.mxu0
        %v945 = vadd.f32 %v846, %v944
        %v946 = vpop.f32.mrf.mxu0
        %v947 = vadd.f32 %v846, %v946
        %948 = vmatprep.mubr.f32.mxu0 0.0
        %949 = vmatmul.mubr.f32.gmra.mxu0 %v864
        %v950 = vpop.f32.mrf.mxu0
        %v951 = vadd.f32 %v851, %v950
        %v952 = vpop.f32.mrf.mxu0
        %v953 = vadd.f32 %v851, %v952
        %954 = vdwg.mxu0
        %955 = vmatprep.subr.mxu0 0.0
        %956 = vmatpush1.msra.mxu0 0.0
        %957 = vmatprep.subr.mxu0 0.0
        %958 = vmatpush1.msra.mxu0 0.0
        %959 = vmatprep.subr.mxu0 0.0
        %960 = vmatpush1.msra.mxu0 0.0
        %961 = vmatprep.subr.mxu0 0.0
        %962 = vmatpush1.msra.mxu0 0.0
        %963 = vmatprep.subr.mxu0 0.0
        %964 = vmatpush1.msra.mxu0 0.0
        %965 = vmatprep.subr.mxu0 0.0
        %966 = vmatpush1.msra.mxu0 0.0
        %967 = vmatprep.subr.mxu0 0.0
        %968 = vmatpush1.msra.mxu0 0.0
        %969 = vmatprep.subr.mxu0 0.0
        %970 = vmatpush1.msra.mxu0 0.0
        %971 = vmatprep.subr.mxu0 0.0
        %972 = vmatpush1.msra.mxu0 0.0
        %973 = vmatprep.subr.mxu0 0.0
        %974 = vmatpush1.msra.mxu0 0.0
        %975 = vmatprep.subr.mxu0 0.0
        %976 = vmatpush1.msra.mxu0 0.0
        %977 = vmatprep.subr.mxu0 0.0
        %978 = vmatpush1.msra.mxu0 0.0
        %979 = vmatprep.subr.mxu0 %v824
        %980 = vmatpush1.msra.mxu0 %v823
        %981 = vmatprep.subr.mxu0 %v820
        %982 = vmatpush1.msra.mxu0 %v819
        %983 = vmatprep.subr.mxu0 %v816
        %984 = vmatpush1.msra.mxu0 %v815
        %985 = vmatprep.subr.mxu0 %v812
        %986 = vmatpush1.msra.mxu0 %v811
        %987 = vmatprep.subr.mxu0 0.0
        %988 = vmatpush2.msra.mxu0 0.0
        %989 = vmatprep.subr.mxu0 0.0
        %990 = vmatpush2.msra.mxu0 0.0
        %991 = vmatprep.subr.mxu0 0.0
        %992 = vmatpush2.msra.mxu0 0.0
        %993 = vmatprep.subr.mxu0 0.0
        %994 = vmatpush2.msra.mxu0 0.0
        %995 = vmatprep.subr.mxu0 0.0
        %996 = vmatpush2.msra.mxu0 0.0
        %997 = vmatprep.subr.mxu0 0.0
        %998 = vmatpush2.msra.mxu0 0.0
        %999 = vmatprep.subr.mxu0 0.0
        %1000 = vmatpush2.msra.mxu0 0.0
        %1001 = vmatprep.subr.mxu0 0.0
        %1002 = vmatpush2.msra.mxu0 0.0
        %1003 = vmatprep.subr.mxu0 0.0
        %1004 = vmatpush2.msra.mxu0 0.0
        %1005 = vmatprep.subr.mxu0 0.0
        %1006 = vmatpush2.msra.mxu0 0.0
        %1007 = vmatprep.subr.mxu0 0.0
        %1008 = vmatpush2.msra.mxu0 0.0
        %1009 = vmatprep.subr.mxu0 0.0
        %1010 = vmatpush2.msra.mxu0 0.0
        %1011 = vmatprep.subr.mxu0 0.0
        %1012 = vmatpush2.msra.mxu0 0.0
        %1013 = vmatprep.subr.mxu0 0.0
        %1014 = vmatpush2.msra.mxu0 0.0
        %1015 = vmatprep.subr.mxu0 0.0
        %1016 = vmatpush2.msra.mxu0 0.0
        %1017 = vmatprep.subr.mxu0 0.0
        %1018 = vmatpush2.msra.mxu0 0.0
        %1019 = vmatprep.mubr.f32.mxu0 0.0
        %1020 = vmatmul.mubr.f32.gmra.mxu0 %v855
        %v1021 = vpop.f32.mrf.mxu0
        %v1022 = vadd.f32 %v836, %v1021
        %v1023 = vpop.f32.mrf.mxu0
        %v1024 = vadd.f32 %v836, %v1023
        %1025 = vmatprep.mubr.f32.mxu0 0.0
        %1026 = vmatmul.mubr.f32.gmra.mxu0 %v858
        %v1027 = vpop.f32.mrf.mxu0
        %v1028 = vadd.f32 %v841, %v1027
        %v1029 = vpop.f32.mrf.mxu0
        %v1030 = vadd.f32 %v841, %v1029
        %1031 = vmatprep.mubr.f32.mxu0 0.0
        %1032 = vmatmul.mubr.f32.gmra.mxu0 %v861
        %v1033 = vpop.f32.mrf.mxu0
        %v1034 = vadd.f32 %v846, %v1033
        %v1035 = vpop.f32.mrf.mxu0
        %v1036 = vadd.f32 %v846, %v1035
        %1037 = vmatprep.mubr.f32.mxu0 0.0
        %1038 = vmatmul.mubr.f32.gmra.mxu0 %v864
        %v1039 = vpop.f32.mrf.mxu0
        %v1040 = vadd.f32 %v851, %v1039
        %v1041 = vpop.f32.mrf.mxu0
        %v1042 = vadd.f32 %v851, %v1041
        %1043 = vdwg.mxu0
        %v1044 = vmax.f32 %v933, 0.0
        %v1045 = vmax.f32 %v935, 0.0
        %v1046 = vmax.f32 %v1022, 0.0
        %v1047 = vmax.f32 %v1024, 0.0
        %v1048 = vmax.f32 %v939, 0.0
        %v1049 = vmax.f32 %v941, 0.0
        %v1050 = vmax.f32 %v1028, 0.0
        %v1051 = vmax.f32 %v1030, 0.0
        %v1052 = vmax.f32 %v945, 0.0
        %v1053 = vmax.f32 %v947, 0.0
        %v1054 = vmax.f32 %v1034, 0.0
        %v1055 = vmax.f32 %v1036, 0.0
        %v1056 = vmax.f32 %v951, 0.0
        %v1057 = vmax.f32 %v953, 0.0
        %v1058 = vmax.f32 %v1040, 0.0
        %v1059 = vmax.f32 %v1042, 0.0
        %v1060 = vld [vmem:[%s5] sm:$0xff]
        %v1061 = vld [vmem:[%s5 + $0x8] sm:$0xff]
        %v1062 = vld [vmem:[%s6] sm:$0xff]
        %v1063 = vld [vmem:[%s6 + $0x8] sm:$0xff]
        %1065 = vset.pattern.permute.xlu0 0
        %1066 = vperm.xlu0 %1065, %v1062
        %v1067 = vpop.permute.xlu0 %1066
        %1070 = vset.pattern.permute.xlu0 0
        %1071 = vperm.xlu0 %1070, %v1063
        %v1072 = vpop.permute.xlu0 %1071
        %v1075 = vsel %vm853, %v1060, 0
        %v1078 = vsel %vm853, %v1061, 0
        %1080 = vmatprep.subr.mxu0 0.0
        %1081 = vmatpush1.msra.mxu0 0.0
        %1082 = vmatprep.subr.mxu0 0.0
        %1083 = vmatpush1.msra.mxu0 0.0
        %1084 = vmatprep.subr.mxu0 0.0
        %1085 = vmatpush1.msra.mxu0 0.0
        %1086 = vmatprep.subr.mxu0 0.0
        %1087 = vmatpush1.msra.mxu0 0.0
        %1088 = vmatprep.subr.mxu0 0.0
        %1089 = vmatpush1.msra.mxu0 0.0
        %1090 = vmatprep.subr.mxu0 0.0
        %1091 = vmatpush1.msra.mxu0 0.0
        %1092 = vmatprep.subr.mxu0 0.0
        %1093 = vmatpush1.msra.mxu0 0.0
        %1094 = vmatprep.subr.mxu0 0.0
        %1095 = vmatpush1.msra.mxu0 0.0
        %1096 = vmatprep.subr.mxu0 0.0
        %1097 = vmatpush1.msra.mxu0 0.0
        %1098 = vmatprep.subr.mxu0 0.0
        %1099 = vmatpush1.msra.mxu0 0.0
        %1100 = vmatprep.subr.mxu0 0.0
        %1101 = vmatpush1.msra.mxu0 0.0
        %1102 = vmatprep.subr.mxu0 0.0
        %1103 = vmatpush1.msra.mxu0 0.0
        %1104 = vmatprep.subr.mxu0 %v1057
        %1105 = vmatpush1.msra.mxu0 %v1056
        %1106 = vmatprep.subr.mxu0 %v1053
        %1107 = vmatpush1.msra.mxu0 %v1052
        %1108 = vmatprep.subr.mxu0 %v1049
        %1109 = vmatpush1.msra.mxu0 %v1048
        %1110 = vmatprep.subr.mxu0 %v1045
        %1111 = vmatpush1.msra.mxu0 %v1044
        %1112 = vmatprep.subr.mxu0 0.0
        %1113 = vmatpush2.msra.mxu0 0.0
        %1114 = vmatprep.subr.mxu0 0.0
        %1115 = vmatpush2.msra.mxu0 0.0
        %1116 = vmatprep.subr.mxu0 0.0
        %1117 = vmatpush2.msra.mxu0 0.0
        %1118 = vmatprep.subr.mxu0 0.0
        %1119 = vmatpush2.msra.mxu0 0.0
        %1120 = vmatprep.subr.mxu0 0.0
        %1121 = vmatpush2.msra.mxu0 0.0
        %1122 = vmatprep.subr.mxu0 0.0
        %1123 = vmatpush2.msra.mxu0 0.0
        %1124 = vmatprep.subr.mxu0 0.0
        %1125 = vmatpush2.msra.mxu0 0.0
        %1126 = vmatprep.subr.mxu0 0.0
        %1127 = vmatpush2.msra.mxu0 0.0
        %1128 = vmatprep.subr.mxu0 0.0
        %1129 = vmatpush2.msra.mxu0 0.0
        %1130 = vmatprep.subr.mxu0 0.0
        %1131 = vmatpush2.msra.mxu0 0.0
        %1132 = vmatprep.subr.mxu0 0.0
        %1133 = vmatpush2.msra.mxu0 0.0
        %1134 = vmatprep.subr.mxu0 0.0
        %1135 = vmatpush2.msra.mxu0 0.0
        %1136 = vmatprep.subr.mxu0 0.0
        %1137 = vmatpush2.msra.mxu0 0.0
        %1138 = vmatprep.subr.mxu0 0.0
        %1139 = vmatpush2.msra.mxu0 0.0
        %1140 = vmatprep.subr.mxu0 0.0
        %1141 = vmatpush2.msra.mxu0 0.0
        %1142 = vmatprep.subr.mxu0 0.0
        %1143 = vmatpush2.msra.mxu0 0.0
        %1144 = vmatprep.mubr.f32.mxu0 0.0
        %1145 = vmatmul.mubr.f32.gmra.mxu0 %v1075
        %v1146 = vpop.f32.mrf.mxu0
        %v1147 = vadd.f32 %v1067, %v1146
        %v1148 = vpop.f32.mrf.mxu0
        %v1149 = vadd.f32 %v1067, %v1148
        %1150 = vmatprep.mubr.f32.mxu0 0.0
        %1151 = vmatmul.mubr.f32.gmra.mxu0 %v1078
        %v1152 = vpop.f32.mrf.mxu0
        %v1153 = vadd.f32 %v1072, %v1152
        %v1154 = vpop.f32.mrf.mxu0
        %v1155 = vadd.f32 %v1072, %v1154
        %1156 = vdwg.mxu0
        %1157 = vmatprep.subr.mxu0 0.0
        %1158 = vmatpush1.msra.mxu0 0.0
        %1159 = vmatprep.subr.mxu0 0.0
        %1160 = vmatpush1.msra.mxu0 0.0
        %1161 = vmatprep.subr.mxu0 0.0
        %1162 = vmatpush1.msra.mxu0 0.0
        %1163 = vmatprep.subr.mxu0 0.0
        %1164 = vmatpush1.msra.mxu0 0.0
        %1165 = vmatprep.subr.mxu0 0.0
        %1166 = vmatpush1.msra.mxu0 0.0
        %1167 = vmatprep.subr.mxu0 0.0
        %1168 = vmatpush1.msra.mxu0 0.0
        %1169 = vmatprep.subr.mxu0 0.0
        %1170 = vmatpush1.msra.mxu0 0.0
        %1171 = vmatprep.subr.mxu0 0.0
        %1172 = vmatpush1.msra.mxu0 0.0
        %1173 = vmatprep.subr.mxu0 0.0
        %1174 = vmatpush1.msra.mxu0 0.0
        %1175 = vmatprep.subr.mxu0 0.0
        %1176 = vmatpush1.msra.mxu0 0.0
        %1177 = vmatprep.subr.mxu0 0.0
        %1178 = vmatpush1.msra.mxu0 0.0
        %1179 = vmatprep.subr.mxu0 0.0
        %1180 = vmatpush1.msra.mxu0 0.0
        %1181 = vmatprep.subr.mxu0 %v1059
        %1182 = vmatpush1.msra.mxu0 %v1058
        %1183 = vmatprep.subr.mxu0 %v1055
        %1184 = vmatpush1.msra.mxu0 %v1054
        %1185 = vmatprep.subr.mxu0 %v1051
        %1186 = vmatpush1.msra.mxu0 %v1050
        %1187 = vmatprep.subr.mxu0 %v1047
        %1188 = vmatpush1.msra.mxu0 %v1046
        %1189 = vmatprep.subr.mxu0 0.0
        %1190 = vmatpush2.msra.mxu0 0.0
        %1191 = vmatprep.subr.mxu0 0.0
        %1192 = vmatpush2.msra.mxu0 0.0
        %1193 = vmatprep.subr.mxu0 0.0
        %1194 = vmatpush2.msra.mxu0 0.0
        %1195 = vmatprep.subr.mxu0 0.0
        %1196 = vmatpush2.msra.mxu0 0.0
        %1197 = vmatprep.subr.mxu0 0.0
        %1198 = vmatpush2.msra.mxu0 0.0
        %1199 = vmatprep.subr.mxu0 0.0
        %1200 = vmatpush2.msra.mxu0 0.0
        %1201 = vmatprep.subr.mxu0 0.0
        %1202 = vmatpush2.msra.mxu0 0.0
        %1203 = vmatprep.subr.mxu0 0.0
        %1204 = vmatpush2.msra.mxu0 0.0
        %1205 = vmatprep.subr.mxu0 0.0
        %1206 = vmatpush2.msra.mxu0 0.0
        %1207 = vmatprep.subr.mxu0 0.0
        %1208 = vmatpush2.msra.mxu0 0.0
        %1209 = vmatprep.subr.mxu0 0.0
        %1210 = vmatpush2.msra.mxu0 0.0
        %1211 = vmatprep.subr.mxu0 0.0
        %1212 = vmatpush2.msra.mxu0 0.0
        %1213 = vmatprep.subr.mxu0 0.0
        %1214 = vmatpush2.msra.mxu0 0.0
        %1215 = vmatprep.subr.mxu0 0.0
        %1216 = vmatpush2.msra.mxu0 0.0
        %1217 = vmatprep.subr.mxu0 0.0
        %1218 = vmatpush2.msra.mxu0 0.0
        %1219 = vmatprep.subr.mxu0 0.0
        %1220 = vmatpush2.msra.mxu0 0.0
        %1221 = vmatprep.mubr.f32.mxu0 0.0
        %1222 = vmatmul.mubr.f32.gmra.mxu0 %v1075
        %v1223 = vpop.f32.mrf.mxu0
        %v1224 = vadd.f32 %v1067, %v1223
        %v1225 = vpop.f32.mrf.mxu0
        %v1226 = vadd.f32 %v1067, %v1225
        %1227 = vmatprep.mubr.f32.mxu0 0.0
        %1228 = vmatmul.mubr.f32.gmra.mxu0 %v1078
        %v1229 = vpop.f32.mrf.mxu0
        %v1230 = vadd.f32 %v1072, %v1229
        %v1231 = vpop.f32.mrf.mxu0
        %v1232 = vadd.f32 %v1072, %v1231
        %1233 = vdwg.mxu0
        %v1234 = vmax.f32 %v1147, 0.0
        %v1235 = vmax.f32 %v1149, 0.0
        %v1236 = vmax.f32 %v1224, 0.0
        %v1237 = vmax.f32 %v1226, 0.0
        %v1238 = vmax.f32 %v1153, 0.0
        %v1239 = vmax.f32 %v1155, 0.0
        %v1240 = vmax.f32 %v1230, 0.0
        %v1241 = vmax.f32 %v1232, 0.0
        %v1242 = vld [vmem:[%s7] sm:$0xf]
        %v1243 = vld [vmem:[%s8] sm:$0xf]
        %1245 = vset.pattern.permute.xlu0 0
        %1246 = vperm.xlu0 %1245, %v1243
        %v1247 = vpop.permute.xlu0 %1246
        %vm1249 = vcmask 130048
        %v1251 = vsel %vm1249, %v1242, 0
        %1253 = vmatprep.subr.mxu0 0.0
        %1254 = vmatpush1.msra.mxu0 0.0
        %1255 = vmatprep.subr.mxu0 0.0
        %1256 = vmatpush1.msra.mxu0 0.0
        %1257 = vmatprep.subr.mxu0 0.0
        %1258 = vmatpush1.msra.mxu0 0.0
        %1259 = vmatprep.subr.mxu0 0.0
        %1260 = vmatpush1.msra.mxu0 0.0
        %1261 = vmatprep.subr.mxu0 0.0
        %1262 = vmatpush1.msra.mxu0 0.0
        %1263 = vmatprep.subr.mxu0 0.0
        %1264 = vmatpush1.msra.mxu0 0.0
        %1265 = vmatprep.subr.mxu0 0.0
        %1266 = vmatpush1.msra.mxu0 0.0
        %1267 = vmatprep.subr.mxu0 0.0
        %1268 = vmatpush1.msra.mxu0 0.0
        %1269 = vmatprep.subr.mxu0 0.0
        %1270 = vmatpush1.msra.mxu0 0.0
        %1271 = vmatprep.subr.mxu0 0.0
        %1272 = vmatpush1.msra.mxu0 0.0
        %1273 = vmatprep.subr.mxu0 0.0
        %1274 = vmatpush1.msra.mxu0 0.0
        %1275 = vmatprep.subr.mxu0 0.0
        %1276 = vmatpush1.msra.mxu0 0.0
        %1277 = vmatprep.subr.mxu0 0.0
        %1278 = vmatpush1.msra.mxu0 0.0
        %1279 = vmatprep.subr.mxu0 0.0
        %1280 = vmatpush1.msra.mxu0 0.0
        %1281 = vmatprep.subr.mxu0 %v1239
        %1282 = vmatpush1.msra.mxu0 %v1238
        %1283 = vmatprep.subr.mxu0 %v1235
        %1284 = vmatpush1.msra.mxu0 %v1234
        %1285 = vmatprep.subr.mxu0 0.0
        %1286 = vmatpush2.msra.mxu0 0.0
        %1287 = vmatprep.subr.mxu0 0.0
        %1288 = vmatpush2.msra.mxu0 0.0
        %1289 = vmatprep.subr.mxu0 0.0
        %1290 = vmatpush2.msra.mxu0 0.0
        %1291 = vmatprep.subr.mxu0 0.0
        %1292 = vmatpush2.msra.mxu0 0.0
        %1293 = vmatprep.subr.mxu0 0.0
        %1294 = vmatpush2.msra.mxu0 0.0
        %1295 = vmatprep.subr.mxu0 0.0
        %1296 = vmatpush2.msra.mxu0 0.0
        %1297 = vmatprep.subr.mxu0 0.0
        %1298 = vmatpush2.msra.mxu0 0.0
        %1299 = vmatprep.subr.mxu0 0.0
        %1300 = vmatpush2.msra.mxu0 0.0
        %1301 = vmatprep.subr.mxu0 0.0
        %1302 = vmatpush2.msra.mxu0 0.0
        %1303 = vmatprep.subr.mxu0 0.0
        %1304 = vmatpush2.msra.mxu0 0.0
        %1305 = vmatprep.subr.mxu0 0.0
        %1306 = vmatpush2.msra.mxu0 0.0
        %1307 = vmatprep.subr.mxu0 0.0
        %1308 = vmatpush2.msra.mxu0 0.0
        %1309 = vmatprep.subr.mxu0 0.0
        %1310 = vmatpush2.msra.mxu0 0.0
        %1311 = vmatprep.subr.mxu0 0.0
        %1312 = vmatpush2.msra.mxu0 0.0
        %1313 = vmatprep.subr.mxu0 0.0
        %1314 = vmatpush2.msra.mxu0 0.0
        %1315 = vmatprep.subr.mxu0 0.0
        %1316 = vmatpush2.msra.mxu0 0.0
        %1317 = vmatprep.mubr.f32.mxu0 0.0
        %1318 = vmatmul.mubr.f32.gmra.mxu0 %v1251
        %v1319 = vpop.f32.mrf.mxu0
        %v1320 = vadd.f32 %v1247, %v1319
        %v1321 = vpop.f32.mrf.mxu0
        %v1322 = vadd.f32 %v1247, %v1321
        %1323 = vdwg.mxu0
        %1324 = vmatprep.subr.mxu0 0.0
        %1325 = vmatpush1.msra.mxu0 0.0
        %1326 = vmatprep.subr.mxu0 0.0
        %1327 = vmatpush1.msra.mxu0 0.0
        %1328 = vmatprep.subr.mxu0 0.0
        %1329 = vmatpush1.msra.mxu0 0.0
        %1330 = vmatprep.subr.mxu0 0.0
        %1331 = vmatpush1.msra.mxu0 0.0
        %1332 = vmatprep.subr.mxu0 0.0
        %1333 = vmatpush1.msra.mxu0 0.0
        %1334 = vmatprep.subr.mxu0 0.0
        %1335 = vmatpush1.msra.mxu0 0.0
        %1336 = vmatprep.subr.mxu0 0.0
        %1337 = vmatpush1.msra.mxu0 0.0
        %1338 = vmatprep.subr.mxu0 0.0
        %1339 = vmatpush1.msra.mxu0 0.0
        %1340 = vmatprep.subr.mxu0 0.0
        %1341 = vmatpush1.msra.mxu0 0.0
        %1342 = vmatprep.subr.mxu0 0.0
        %1343 = vmatpush1.msra.mxu0 0.0
        %1344 = vmatprep.subr.mxu0 0.0
        %1345 = vmatpush1.msra.mxu0 0.0
        %1346 = vmatprep.subr.mxu0 0.0
        %1347 = vmatpush1.msra.mxu0 0.0
        %1348 = vmatprep.subr.mxu0 0.0
        %1349 = vmatpush1.msra.mxu0 0.0
        %1350 = vmatprep.subr.mxu0 0.0
        %1351 = vmatpush1.msra.mxu0 0.0
        %1352 = vmatprep.subr.mxu0 %v1241
        %1353 = vmatpush1.msra.mxu0 %v1240
        %1354 = vmatprep.subr.mxu0 %v1237
        %1355 = vmatpush1.msra.mxu0 %v1236
        %1356 = vmatprep.subr.mxu0 0.0
        %1357 = vmatpush2.msra.mxu0 0.0
        %1358 = vmatprep.subr.mxu0 0.0
        %1359 = vmatpush2.msra.mxu0 0.0
        %1360 = vmatprep.subr.mxu0 0.0
        %1361 = vmatpush2.msra.mxu0 0.0
        %1362 = vmatprep.subr.mxu0 0.0
        %1363 = vmatpush2.msra.mxu0 0.0
        %1364 = vmatprep.subr.mxu0 0.0
        %1365 = vmatpush2.msra.mxu0 0.0
        %1366 = vmatprep.subr.mxu0 0.0
        %1367 = vmatpush2.msra.mxu0 0.0
        %1368 = vmatprep.subr.mxu0 0.0
        %1369 = vmatpush2.msra.mxu0 0.0
        %1370 = vmatprep.subr.mxu0 0.0
        %1371 = vmatpush2.msra.mxu0 0.0
        %1372 = vmatprep.subr.mxu0 0.0
        %1373 = vmatpush2.msra.mxu0 0.0
        %1374 = vmatprep.subr.mxu0 0.0
        %1375 = vmatpush2.msra.mxu0 0.0
        %1376 = vmatprep.subr.mxu0 0.0
        %1377 = vmatpush2.msra.mxu0 0.0
        %1378 = vmatprep.subr.mxu0 0.0
        %1379 = vmatpush2.msra.mxu0 0.0
        %1380 = vmatprep.subr.mxu0 0.0
        %1381 = vmatpush2.msra.mxu0 0.0
        %1382 = vmatprep.subr.mxu0 0.0
        %1383 = vmatpush2.msra.mxu0 0.0
        %1384 = vmatprep.subr.mxu0 0.0
        %1385 = vmatpush2.msra.mxu0 0.0
        %1386 = vmatprep.subr.mxu0 0.0
        %1387 = vmatpush2.msra.mxu0 0.0
        %1388 = vmatprep.mubr.f32.mxu0 0.0
        %1389 = vmatmul.mubr.f32.gmra.mxu0 %v1251
        %v1390 = vpop.f32.mrf.mxu0
        %v1391 = vadd.f32 %v1247, %v1390
        %v1392 = vpop.f32.mrf.mxu0
        %v1393 = vadd.f32 %v1247, %v1392
        %1394 = vdwg.mxu0
        %v1399 = vcombine.low %v1320, %v1322
        %v1400 = vcombine.low %v1391, %v1393
        %1403 = vst [vmem:[%s326] sm:$0xff] %v1399
        %1404 = vst [vmem:[%s326 + $0x8] sm:$0xff] %v1400
        %s1405 = sand.u32 %s225, 1
        %s1406 = scalar_lea.sflag [#allocation3], %s1405
        %s1407 = sand.u32 %s225, 1
        %s1408 = smul.addr %s1407, 16
        %s1409 = scalar_lea.vmem [#allocation2], %s1408
        // Predicated region
        $region57: #{tpu_custom_call.1} parent=55 // pred_check
          %p1410 = pneg %p235
        $region58: #{tpu_custom_call.1} parent=55 // pred_check_branch
          %1412 = sbr.rel (%p1410) target = $region60
        $region59: #{tpu_custom_call.1} parent=55 // pred_region
          %s1413 = smul.u32 4, %s23
          %s1415 = ssub.s32 256, 256
          %1416 = vsyncadd %s1406, %s1415
          %s1417 = smul.addr %s1413, 64
          %s1418 = scalar_lea.hbm %s9, %s1417
          %s1420 = sshll.u32 %s1409, 4
          %s1421 = int_to_ptr.vmem [resolvable:$true] %s1420
          %1423 = dma.vmem_to_hbm [thread:$0]  %s1421, 256, %s1418, %s1406
        $region60: #{tpu_custom_call.1} parent=55 // pred_fallthru
          _
      $region56: #{tpu_custom_call.1} parent=5 // pred_fallthru
        _
      %p1424 = scmp.le.s32.totalorder 2, %s18
      // Predicated region
      $region61: #{tpu_custom_call.1} parent=5 // pred_check
        %p1425 = pneg %p1424
      $region62: #{tpu_custom_call.1} parent=5 // pred_check_branch
        %1427 = sbr.rel (%p1425) target = $region64
      $region63: #{tpu_custom_call.1} parent=5 // pred_region
        %s1428 = ssub.s32 %s18, 2
        // Predicated region
        $region65: #{tpu_custom_call.1} parent=63 // pred_check
          %p1429 = pneg %p241
        $region66: #{tpu_custom_call.1} parent=63 // pred_check_branch
          %1431 = sbr.rel (%p1429) target = $region68
        $region67: #{tpu_custom_call.1} parent=63 // pred_region
          %s1432 = sand.u32 %s226, 1
          %s1433 = scalar_lea.sflag [#allocation3], %s1432
          %s1434 = sand.u32 %s226, 1
          %s1435 = smul.addr %s1434, 16
          %s1436 = scalar_lea.vmem [#allocation2], %s1435
          %1437 = dma.done %s1433, 256
        $region68: #{tpu_custom_call.1} parent=63 // pred_fallthru
          _
      $region64: #{tpu_custom_call.1} parent=5 // pred_fallthru
        _
    $region6: #{tpu_custom_call.1} parent=1 // loop_footer
      %s22 = sadd.s32 1, %s18
    $region7: #{tpu_custom_call.1} parent=1 // loop_footer_branch
      %17 = sbr.rel target = $region3
    $region8: #{tpu_custom_call.1} parent=1 // loop_exit
      _
    %1438 = vsyncpa [#allocation3], 1
    %s1439 = scalar_lea.sflag [#allocation3], 1
    %1440 = vsyncpa %s1439, 1

</llo_original>
